<compile_context>
chip_gen: v6e
topology: v6e:2x2x1
jax: 0.10.0
libtpu: 0.0.40
codegen_flags: <defaults>
</compile_context>

<pallas_src>
import jax
import jax.numpy as jnp
from jax.experimental import pallas as pl
from jax.experimental.pallas import tpu as pltpu

# ----------------------------- model dims ---------------------------------
CANDLE_DIM = 16               # candlestick_dim
SENT_DIM = 16                 # sentiment_dim
FUSION_DIM = CANDLE_DIM + SENT_DIM
FUSION_LAYERS = (32, 16)      # fusion_layers
OUT_DIM = 3                   # output_dim
OUT_PAD = 128                 # lane-dense padded output width
BATCH = 16                    # whole batch handled in one grid step


# ----------------------------- Pallas kernel -------------------------------
def _fusion_kernel(c_ref, s_ref,
                   gwc_ref, gws_ref, gb_ref,     # gate weights (VMEM rows) + biases (SMEM)
                   w1_ref, b1_ref,
                   w2_ref, b2_ref,
                   wo_ref, bo_ref,
                   o_ref):
    c = c_ref[...]                                   # (B, Cd) f32
    s = s_ref[...]                                   # (B, Sd) f32

    # attention gates on VPU/XLU (no MXU pass): sigmoid(sum(x * w_row) + b)
    zc = jnp.sum(c * gwc_ref[...], axis=-1, keepdims=True) + gb_ref[0]
    zs = jnp.sum(s * gws_ref[...], axis=-1, keepdims=True) + gb_ref[1]
    c_gated = c * jax.nn.sigmoid(zc)                 # (B, Cd)
    s_gated = s * jax.nn.sigmoid(zs)                 # (B, Sd)

    # fused fusion-layer-1: one (B,32)x(32,32) MXU dot on the gated concat
    x = jnp.concatenate([c_gated, s_gated], axis=1)  # (B, 32), fits one vreg lane-wise
    h = jnp.dot(x, w1_ref[...], preferred_element_type=jnp.float32) + b1_ref[...]
    h = jnp.maximum(h, 0.0)                          # ReLU (dropout = identity, eval)

    # fusion layer 2
    h = jnp.dot(h, w2_ref[...], preferred_element_type=jnp.float32) + b2_ref[...]
    h = jnp.maximum(h, 0.0)

    # output layer, lane-dense padded to 128 columns (real logits in lanes [0,3))
    o_ref[...] = (jnp.dot(h, wo_ref[...], preferred_element_type=jnp.float32)
                  + bo_ref[...]).astype(o_ref.dtype)


def attention_fusion_forward(c_feat, s_feat, params):
    """c_feat: (B, CANDLE_DIM), s_feat: (B, SENT_DIM) -> (B, OUT_DIM)."""
    (wca, bca, wsa, bsa, w1, b1, w2, b2, wo, bo) = params
    B = c_feat.shape[0]

    # lane-dense output path: zero-pad the output projection to 128 columns.
    wo_pad = jnp.pad(wo, ((0, 0), (0, OUT_PAD - OUT_DIM)))
    bo_pad = jnp.pad(bo, ((0, 0), (0, OUT_PAD - OUT_DIM)))
    # scalar gate biases -> one tiny SMEM array [bca, bsa]
    gate_b = jnp.concatenate([bca.reshape(-1), bsa.reshape(-1)])   # (2,)

    def full(shape):
        # block == full array (legal: block_shape equals the array dims)
        return pl.BlockSpec(shape, lambda i: (0, 0))

    out_padded = pl.pallas_call(
        _fusion_kernel,
        out_shape=jax.ShapeDtypeStruct((B, OUT_PAD), jnp.float32),
        grid_spec=pltpu.PrefetchScalarGridSpec(
            num_scalar_prefetch=0,
            grid=(1,),                       # whole (tiny) problem in one step
            in_specs=[
                full((B, CANDLE_DIM)),       # candlestick features
                full((B, SENT_DIM)),         # sentiment features
                full(wca.shape),             # gate weight row (1, Cd)
                full(wsa.shape),             # gate weight row (1, Sd)
                pl.BlockSpec(memory_space=pltpu.MemorySpace.SMEM),   # gate biases
                full(w1.shape), full(b1.shape),
                full(w2.shape), full(b2.shape),
                full(wo_pad.shape), full(bo_pad.shape),
            ],
            out_specs=pl.BlockSpec((B, OUT_PAD), lambda i: (0, 0)),
        ),
        compiler_params=pltpu.CompilerParams(
            dimension_semantics=("arbitrary",)),   # single step: keep on one TC
    )(c_feat, s_feat, wca, wsa, gate_b, w1, b1, w2, b2, wo_pad, bo_pad)

    return out_padded[:, :OUT_DIM]


# ----------------------------- param init ----------------------------------
def init_params(key):
    ks = jax.random.split(key, 10)
    h1, h2 = FUSION_LAYERS

    def lin(kw, kb, fan_in, fan_out):
        # deterministic Kaiming-ish init; weights stored as (in, out), nonzero bias
        w = jax.random.normal(kw, (fan_in, fan_out), jnp.float32) / jnp.sqrt(fan_in)
        b = jax.random.normal(kb, (1, fan_out), jnp.float32) * 0.1
        return w, b

    wca_c, bca = lin(ks[0], ks[1], CANDLE_DIM, 1)     # (Cd,1), (1,1)
    wsa_c, bsa = lin(ks[2], ks[3], SENT_DIM, 1)
    w1, b1 = lin(ks[4], ks[5], FUSION_DIM, h1)
    w2, b2 = lin(ks[6], ks[7], h1, h2)
    wo, bo = lin(ks[8], ks[9], h2, OUT_DIM)
    # gate weights kept as (1, in) rows for the in-kernel VPU broadcast-reduce
    return (wca_c.T, bca, wsa_c.T, bsa, w1, b1, w2, b2, wo, bo)


# ----------------------------- reference ------------------------------------
def reference_forward(c, s, params):
    (wca, bca, wsa, bsa, w1, b1, w2, b2, wo, bo) = params
    c_att = jax.nn.sigmoid(c @ wca.T + bca)
    s_att = jax.nn.sigmoid(s @ wsa.T + bsa)
    x = jnp.concatenate([c * c_att, s * s_att], axis=1)
    x = jax.nn.relu(x @ w1 + b1)
    x = jax.nn.relu(x @ w2 + b2)
    return x @ wo + bo


# ----------------------------- main ------------------------------------------
if __name__ == "__main__":
    key = jax.random.PRNGKey(0)
    kc, ks_, kp = jax.random.split(key, 3)

    candle = jax.random.normal(kc, (BATCH, CANDLE_DIM), jnp.float32)
    sent = jax.random.normal(ks_, (BATCH, SENT_DIM), jnp.float32)
    params = init_params(kp)

    out = attention_fusion_forward(candle, sent, params)
    out = jax.block_until_ready(out)

    ref = reference_forward(candle, sent, params)
    assert out.shape == (BATCH, OUT_DIM)
    assert jnp.allclose(out, ref, atol=1e-4, rtol=1e-4)

    print("KERNEL_OK")
</pallas_src>

<mosaic_0001>
module attributes {stable_mosaic.version = 11 : i64} {
  func.func @_fusion_kernel(%arg0: i32, %arg1: memref<16x16xf32, #tpu.memory_space<vmem>>, %arg2: memref<16x16xf32, #tpu.memory_space<vmem>>, %arg3: memref<1x16xf32, #tpu.memory_space<vmem>>, %arg4: memref<1x16xf32, #tpu.memory_space<vmem>>, %arg5: memref<2xf32, #tpu.memory_space<smem>>, %arg6: memref<32x32xf32, #tpu.memory_space<vmem>>, %arg7: memref<1x32xf32, #tpu.memory_space<vmem>>, %arg8: memref<32x16xf32, #tpu.memory_space<vmem>>, %arg9: memref<1x16xf32, #tpu.memory_space<vmem>>, %arg10: memref<16x128xf32, #tpu.memory_space<vmem>>, %arg11: memref<1x128xf32, #tpu.memory_space<vmem>>, %arg12: memref<16x128xf32, #tpu.memory_space<vmem>>) attributes {dimension_semantics = [#tpu.dimension_semantics<arbitrary>], iteration_bounds = array<i64: 1>, scalar_prefetch = 0 : i64, scratch_operands = 0 : i64, tpu.core_type = #tpu.core_type<tc>, window_params = [{pipeline_mode = #tpu.pipeline_mode<synchronous>, transform_indices = @transform_0, window_bounds = array<i64: 16, 16>}, {pipeline_mode = #tpu.pipeline_mode<synchronous>, transform_indices = @transform_1, window_bounds = array<i64: 16, 16>}, {pipeline_mode = #tpu.pipeline_mode<synchronous>, transform_indices = @transform_2, window_bounds = array<i64: 1, 16>}, {pipeline_mode = #tpu.pipeline_mode<synchronous>, transform_indices = @transform_3, window_bounds = array<i64: 1, 16>}, {transform_indices = @transform_4, window_bounds = array<i64: 2>}, {pipeline_mode = #tpu.pipeline_mode<synchronous>, transform_indices = @transform_5, window_bounds = array<i64: 32, 32>}, {pipeline_mode = #tpu.pipeline_mode<synchronous>, transform_indices = @transform_6, window_bounds = array<i64: 1, 32>}, {pipeline_mode = #tpu.pipeline_mode<synchronous>, transform_indices = @transform_7, window_bounds = array<i64: 32, 16>}, {pipeline_mode = #tpu.pipeline_mode<synchronous>, transform_indices = @transform_8, window_bounds = array<i64: 1, 16>}, {pipeline_mode = #tpu.pipeline_mode<synchronous>, transform_indices = @transform_9, window_bounds = array<i64: 16, 128>}, {pipeline_mode = #tpu.pipeline_mode<synchronous>, transform_indices = @transform_10, window_bounds = array<i64: 1, 128>}, {pipeline_mode = #tpu.pipeline_mode<synchronous>, transform_indices = @transform_11, window_bounds = array<i64: 16, 128>}]} {
    %c0 = arith.constant 0 : index
    %c0_0 = arith.constant 0 : index
    %0 = vector.load %arg1[%c0, %c0_0] : memref<16x16xf32, #tpu.memory_space<vmem>>, vector<16x16xf32>
    %c0_1 = arith.constant 0 : index
    %c0_2 = arith.constant 0 : index
    %1 = vector.load %arg2[%c0_1, %c0_2] : memref<16x16xf32, #tpu.memory_space<vmem>>, vector<16x16xf32>
    %c0_3 = arith.constant 0 : index
    %c0_4 = arith.constant 0 : index
    %2 = vector.load %arg3[%c0_3, %c0_4] : memref<1x16xf32, #tpu.memory_space<vmem>>, vector<1x16xf32>
    %3 = vector.broadcast %2 : vector<1x16xf32> to vector<16x16xf32>
    %4 = arith.mulf %0, %3 : vector<16x16xf32>
    %cst = arith.constant dense<0.000000e+00> : vector<16xf32>
    %5 = vector.multi_reduction <add>, %4, %cst [1] : vector<16x16xf32> to vector<16xf32>
    %6 = vector.shape_cast %5 : vector<16xf32> to vector<16x1xf32>
    %c0_5 = arith.constant 0 : index
    %7 = memref.load %arg5[%c0_5] : memref<2xf32, #tpu.memory_space<smem>>
    %8 = vector.broadcast %7 : f32 to vector<16x1xf32>
    %9 = arith.addf %6, %8 : vector<16x1xf32>
    %c0_6 = arith.constant 0 : index
    %c0_7 = arith.constant 0 : index
    %10 = vector.load %arg4[%c0_6, %c0_7] : memref<1x16xf32, #tpu.memory_space<vmem>>, vector<1x16xf32>
    %11 = vector.broadcast %10 : vector<1x16xf32> to vector<16x16xf32>
    %12 = arith.mulf %1, %11 : vector<16x16xf32>
    %cst_8 = arith.constant dense<0.000000e+00> : vector<16xf32>
    %13 = vector.multi_reduction <add>, %12, %cst_8 [1] : vector<16x16xf32> to vector<16xf32>
    %14 = vector.shape_cast %13 : vector<16xf32> to vector<16x1xf32>
    %c1 = arith.constant 1 : index
    %15 = memref.load %arg5[%c1] : memref<2xf32, #tpu.memory_space<smem>>
    %16 = vector.broadcast %15 : f32 to vector<16x1xf32>
    %17 = arith.addf %14, %16 : vector<16x1xf32>
    %18 = arith.negf %9 : vector<16x1xf32>
    %19 = math.exp %18 : vector<16x1xf32>
    %cst_9 = arith.constant 1.000000e+00 : f32
    %20 = vector.broadcast %cst_9 : f32 to vector<16x1xf32>
    %21 = arith.addf %20, %19 : vector<16x1xf32>
    %22 = arith.divf %20, %21 : vector<16x1xf32>
    %23 = vector.broadcast %22 : vector<16x1xf32> to vector<16x16xf32>
    %24 = arith.mulf %0, %23 : vector<16x16xf32>
    %25 = arith.negf %17 : vector<16x1xf32>
    %26 = math.exp %25 : vector<16x1xf32>
    %cst_10 = arith.constant 1.000000e+00 : f32
    %27 = vector.broadcast %cst_10 : f32 to vector<16x1xf32>
    %28 = arith.addf %27, %26 : vector<16x1xf32>
    %29 = arith.divf %27, %28 : vector<16x1xf32>
    %30 = vector.broadcast %29 : vector<16x1xf32> to vector<16x16xf32>
    %31 = arith.mulf %1, %30 : vector<16x16xf32>
    %32 = tpu.concatenate %24, %31 in 1 : vector<16x16xf32>, vector<16x16xf32> -> vector<16x32xf32>
    %c0_11 = arith.constant 0 : index
    %c0_12 = arith.constant 0 : index
    %33 = vector.load %arg6[%c0_11, %c0_12] : memref<32x32xf32, #tpu.memory_space<vmem>>, vector<32x32xf32>
    %cst_13 = arith.constant dense<0.000000e+00> : vector<16x32xf32>
    %34 = tpu.matmul %32, %33, %cst_13 {dimension_numbers = #tpu.dot_dimension_numbers<[1], [0], [0], [1], [0, 0, 1, 1], [], []>} : vector<16x32xf32>, vector<32x32xf32>, vector<16x32xf32> -> vector<16x32xf32>
    %c0_14 = arith.constant 0 : index
    %c0_15 = arith.constant 0 : index
    %35 = vector.load %arg7[%c0_14, %c0_15] : memref<1x32xf32, #tpu.memory_space<vmem>>, vector<1x32xf32>
    %36 = vector.broadcast %35 : vector<1x32xf32> to vector<16x32xf32>
    %37 = arith.addf %34, %36 : vector<16x32xf32>
    %cst_16 = arith.constant 0.000000e+00 : f32
    %38 = vector.broadcast %cst_16 : f32 to vector<16x32xf32>
    %39 = arith.maximumf %37, %38 : vector<16x32xf32>
    %c0_17 = arith.constant 0 : index
    %c0_18 = arith.constant 0 : index
    %40 = vector.load %arg8[%c0_17, %c0_18] : memref<32x16xf32, #tpu.memory_space<vmem>>, vector<32x16xf32>
    %cst_19 = arith.constant dense<0.000000e+00> : vector<16x16xf32>
    %41 = tpu.matmul %39, %40, %cst_19 {dimension_numbers = #tpu.dot_dimension_numbers<[1], [0], [0], [1], [0, 0, 1, 1], [], []>} : vector<16x32xf32>, vector<32x16xf32>, vector<16x16xf32> -> vector<16x16xf32>
    %c0_20 = arith.constant 0 : index
    %c0_21 = arith.constant 0 : index
    %42 = vector.load %arg9[%c0_20, %c0_21] : memref<1x16xf32, #tpu.memory_space<vmem>>, vector<1x16xf32>
    %43 = vector.broadcast %42 : vector<1x16xf32> to vector<16x16xf32>
    %44 = arith.addf %41, %43 : vector<16x16xf32>
    %cst_22 = arith.constant 0.000000e+00 : f32
    %45 = vector.broadcast %cst_22 : f32 to vector<16x16xf32>
    %46 = arith.maximumf %44, %45 : vector<16x16xf32>
    %c0_23 = arith.constant 0 : index
    %c0_24 = arith.constant 0 : index
    %47 = vector.load %arg10[%c0_23, %c0_24] : memref<16x128xf32, #tpu.memory_space<vmem>>, vector<16x128xf32>
    %cst_25 = arith.constant dense<0.000000e+00> : vector<16x128xf32>
    %48 = tpu.matmul %46, %47, %cst_25 {dimension_numbers = #tpu.dot_dimension_numbers<[1], [0], [0], [1], [0, 0, 1, 1], [], []>} : vector<16x16xf32>, vector<16x128xf32>, vector<16x128xf32> -> vector<16x128xf32>
    %c0_26 = arith.constant 0 : index
    %c0_27 = arith.constant 0 : index
    %49 = vector.load %arg11[%c0_26, %c0_27] : memref<1x128xf32, #tpu.memory_space<vmem>>, vector<1x128xf32>
    %50 = vector.broadcast %49 : vector<1x128xf32> to vector<16x128xf32>
    %51 = arith.addf %48, %50 : vector<16x128xf32>
    %c0_28 = arith.constant 0 : index
    %c0_29 = arith.constant 0 : index
    %52 = vector.load %arg12[%c0_28, %c0_29] : memref<16x128xf32, #tpu.memory_space<vmem>>, vector<16x128xf32>
    tpu.vector_store %arg12[%c0_28, %c0_29], %51 {strides = array<i32>} : memref<16x128xf32, #tpu.memory_space<vmem>>, vector<16x128xf32>,
    return
  }
  func.func @transform_0(%arg0: i32) -> (i32, i32) {
    %c0_i32 = arith.constant 0 : i32
    %c0_i32_0 = arith.constant 0 : i32
    %c0_i32_1 = arith.constant 0 : i32
    return %c0_i32, %c0_i32_0 : i32, i32
  }
  func.func @transform_1(%arg0: i32) -> (i32, i32) {
    %c0_i32 = arith.constant 0 : i32
    %c0_i32_0 = arith.constant 0 : i32
    %c0_i32_1 = arith.constant 0 : i32
    return %c0_i32, %c0_i32_0 : i32, i32
  }
  func.func @transform_2(%arg0: i32) -> (i32, i32) {
    %c0_i32 = arith.constant 0 : i32
    %c0_i32_0 = arith.constant 0 : i32
    %c0_i32_1 = arith.constant 0 : i32
    return %c0_i32, %c0_i32_0 : i32, i32
  }
  func.func @transform_3(%arg0: i32) -> (i32, i32) {
    %c0_i32 = arith.constant 0 : i32
    %c0_i32_0 = arith.constant 0 : i32
    %c0_i32_1 = arith.constant 0 : i32
    return %c0_i32, %c0_i32_0 : i32, i32
  }
  func.func @transform_4(%arg0: i32) -> i32 {
    %c0_i32 = arith.constant 0 : i32
    %c0_i32_0 = arith.constant 0 : i32
    return %c0_i32 : i32
  }
  func.func @transform_5(%arg0: i32) -> (i32, i32) {
    %c0_i32 = arith.constant 0 : i32
    %c0_i32_0 = arith.constant 0 : i32
    %c0_i32_1 = arith.constant 0 : i32
    return %c0_i32, %c0_i32_0 : i32, i32
  }
  func.func @transform_6(%arg0: i32) -> (i32, i32) {
    %c0_i32 = arith.constant 0 : i32
    %c0_i32_0 = arith.constant 0 : i32
    %c0_i32_1 = arith.constant 0 : i32
    return %c0_i32, %c0_i32_0 : i32, i32
  }
  func.func @transform_7(%arg0: i32) -> (i32, i32) {
    %c0_i32 = arith.constant 0 : i32
    %c0_i32_0 = arith.constant 0 : i32
    %c0_i32_1 = arith.constant 0 : i32
    return %c0_i32, %c0_i32_0 : i32, i32
  }
  func.func @transform_8(%arg0: i32) -> (i32, i32) {
    %c0_i32 = arith.constant 0 : i32
    %c0_i32_0 = arith.constant 0 : i32
    %c0_i32_1 = arith.constant 0 : i32
    return %c0_i32, %c0_i32_0 : i32, i32
  }
  func.func @transform_9(%arg0: i32) -> (i32, i32) {
    %c0_i32 = arith.constant 0 : i32
    %c0_i32_0 = arith.constant 0 : i32
    %c0_i32_1 = arith.constant 0 : i32
    return %c0_i32, %c0_i32_0 : i32, i32
  }
  func.func @transform_10(%arg0: i32) -> (i32, i32) {
    %c0_i32 = arith.constant 0 : i32
    %c0_i32_0 = arith.constant 0 : i32
    %c0_i32_1 = arith.constant 0 : i32
    return %c0_i32, %c0_i32_0 : i32, i32
  }
  func.func @transform_11(%arg0: i32) -> (i32, i32) {
    %c0_i32 = arith.constant 0 : i32
    %c0_i32_0 = arith.constant 0 : i32
    %c0_i32_1 = arith.constant 0 : i32
    return %c0_i32, %c0_i32_0 : i32, i32
  }
}

</mosaic_0001>

<llo_original>
// kernel: tpu_custom_call.1
$region0: #{tpu_custom_call.1}
  #allocation0 [shape = 'u32[]', space=smem, size = 0x4, offset = 0x4, fixed_abs, tag = 'smem constant byte address 0x4 - core index']
  #allocation1 [shape = 'u32[144,128]{1,0:T(1,128)}', space=vmem, size = 0x12000, scoped, tag = 'internal scratch']
  %s0 = inlined_call_operand.vmem [shape: f32[16,16], index: 0, kind: input, shape index: {}]
  %s1 = inlined_call_operand.hbm [shape: f32[16,16], index: 1, kind: input, shape index: {}]
  %s2 = inlined_call_operand.hbm [shape: f32[1,16], index: 2, kind: input, shape index: {}]
  %s3 = inlined_call_operand.hbm [shape: f32[1,16], index: 3, kind: input, shape index: {}]
  %s4 = inlined_call_operand.hbm [shape: f32[2], index: 4, kind: input, shape index: {}]
  %s5 = inlined_call_operand.vmem [shape: f32[32,32], index: 5, kind: input, shape index: {}]
  %s6 = inlined_call_operand.hbm [shape: f32[1,32], index: 6, kind: input, shape index: {}]
  %s7 = inlined_call_operand.vmem [shape: f32[32,16], index: 7, kind: input, shape index: {}]
  %s8 = inlined_call_operand.hbm [shape: f32[1,16], index: 8, kind: input, shape index: {}]
  %s9 = inlined_call_operand.vmem [shape: f32[16,128], index: 9, kind: input, shape index: {}]
  %s10 = inlined_call_operand.vmem [shape: f32[1,128], index: 10, kind: input, shape index: {}]
  %s11 = inlined_call_operand.hbm [shape: f32[16,128], index: 11, kind: output, shape index: {}]
  %s12 = sld [smem:[#allocation0]]
  $region78: #{tpu_custom_call.1} parent=0
    _
  %s14 = ssub.s32 1, %s12
  %s15 = scalar_select 0, %s14, %s12
  $region1: #{tpu_custom_call.1} parent=0
    #allocation2 [shape = 'u8[8192]{0}', space=vmem, size = 0x2000, scoped, tag = 'input window, operand 1, single buffered']
    #allocation3 [shape = 's32[1]{0}', space=sflag, size = 0x4, scoped, tag = 'scoped memory for tpu_custom_call.1']
    #allocation4 [shape = 's32[1]{0}', space=sflag, size = 0x4, scoped, tag = 'scoped memory for tpu_custom_call.1']
    #allocation5 [shape = 's32[1]{0}', space=sflag, size = 0x4, scoped, tag = 'scoped memory for tpu_custom_call.1']
    #allocation6 [shape = 'u8[512]{0}', space=vmem, size = 0x400, scoped, tag = 'input window, operand 2, single buffered']
    #allocation7 [shape = 's32[1]{0}', space=sflag, size = 0x4, scoped, tag = 'scoped memory for tpu_custom_call.1']
    #allocation8 [shape = 'u8[512]{0}', space=vmem, size = 0x400, scoped, tag = 'input window, operand 3, single buffered']
    #allocation9 [shape = 'u8[512]{0}', space=smem, size = 0x200, scoped, tag = 'input window, operand 4, single buffered']
    #allocation10 [shape = 'u8[512]{0}', space=vmem, size = 0x400, scoped, tag = 'input window, operand 6, single buffered']
    #allocation11 [shape = 's32[1]{0}', space=sflag, size = 0x4, scoped, tag = 'scoped memory for tpu_custom_call.1']
    #allocation12 [shape = 'u8[512]{0}', space=vmem, size = 0x400, scoped, tag = 'input window, operand 8, single buffered']
    #allocation13 [shape = 'u8[8192]{0}', space=vmem, size = 0x2000, scoped, tag = 'output window, operand 0, single buffered']
    %16 = vsyncpa [#allocation3], 0
    %17 = vsyncpa [#allocation7], 0
    %18 = vsyncpa [#allocation5], 0
    %19 = vsyncpa [#allocation11], 0
    %20 = vsyncpa [#allocation4], 0
    // Predicated region
    $region2: #{tpu_custom_call.1} parent=1 // pred_check
      _
    $region3: #{tpu_custom_call.1} parent=1 // pred_check_branch
      %22 = sbr.rel (0) target = $region5
    $region4: #{tpu_custom_call.1} parent=1 // pred_region
      _
    $region5: #{tpu_custom_call.1} parent=1 // pred_fallthru
      _
    // Predicated region
    $region6: #{tpu_custom_call.1} parent=1 // pred_check
      _
    $region7: #{tpu_custom_call.1} parent=1 // pred_check_branch
      %24 = sbr.rel (0) target = $region9
    $region8: #{tpu_custom_call.1} parent=1 // pred_region
      %s26 = ssub.s32 256, 256
      %27 = vsyncadd [#allocation3], %s26
      %s28 = sshll.u32 [#allocation2], 4
      %s29 = int_to_ptr.vmem [resolvable:$true] %s28
      %34 = dma.hbm_to_vmem [thread:$0]  %s1, 256, %s29, [#allocation3], 128, 128, 8
    $region9: #{tpu_custom_call.1} parent=1 // pred_fallthru
      _
    // Predicated region
    $region10: #{tpu_custom_call.1} parent=1 // pred_check
      _
    $region11: #{tpu_custom_call.1} parent=1 // pred_check_branch
      %36 = sbr.rel (0) target = $region13
    $region12: #{tpu_custom_call.1} parent=1 // pred_region
      %s38 = ssub.s32 16, 16
      %39 = vsyncadd [#allocation7], %s38
      %s41 = sshll.u32 [#allocation6], 4
      %s42 = int_to_ptr.vmem [resolvable:$true] %s41
      %44 = dma.hbm_to_vmem [thread:$0]  %s2, 16, %s42, [#allocation7]
    $region13: #{tpu_custom_call.1} parent=1 // pred_fallthru
      _
    // Predicated region
    $region14: #{tpu_custom_call.1} parent=1 // pred_check
      _
    $region15: #{tpu_custom_call.1} parent=1 // pred_check_branch
      %46 = sbr.rel (0) target = $region17
    $region16: #{tpu_custom_call.1} parent=1 // pred_region
      %s48 = ssub.s32 16, 16
      %49 = vsyncadd [#allocation7], %s48
      %s51 = sshll.u32 [#allocation8], 4
      %s52 = int_to_ptr.vmem [resolvable:$true] %s51
      %54 = dma.hbm_to_vmem [thread:$0]  %s3, 16, %s52, [#allocation7]
    $region17: #{tpu_custom_call.1} parent=1 // pred_fallthru
      _
    // Predicated region
    $region18: #{tpu_custom_call.1} parent=1 // pred_check
      _
    $region19: #{tpu_custom_call.1} parent=1 // pred_check_branch
      %56 = sbr.rel (0) target = $region21
    $region20: #{tpu_custom_call.1} parent=1 // pred_region
      %s58 = ssub.s32 16, 16
      %59 = vsyncadd [#allocation5], %s58
      %62 = dma.hbm_to_smem %s4, 16, [#allocation9], [#allocation5]
    $region21: #{tpu_custom_call.1} parent=1 // pred_fallthru
      _
    // Predicated region
    $region22: #{tpu_custom_call.1} parent=1 // pred_check
      _
    $region23: #{tpu_custom_call.1} parent=1 // pred_check_branch
      %64 = sbr.rel (0) target = $region25
    $region24: #{tpu_custom_call.1} parent=1 // pred_region
      _
    $region25: #{tpu_custom_call.1} parent=1 // pred_fallthru
      _
    // Predicated region
    $region26: #{tpu_custom_call.1} parent=1 // pred_check
      _
    $region27: #{tpu_custom_call.1} parent=1 // pred_check_branch
      %66 = sbr.rel (0) target = $region29
    $region28: #{tpu_custom_call.1} parent=1 // pred_region
      %s68 = ssub.s32 16, 16
      %69 = vsyncadd [#allocation11], %s68
      %s71 = sshll.u32 [#allocation10], 4
      %s72 = int_to_ptr.vmem [resolvable:$true] %s71
      %74 = dma.hbm_to_vmem [thread:$0]  %s6, 16, %s72, [#allocation11]
    $region29: #{tpu_custom_call.1} parent=1 // pred_fallthru
      _
    // Predicated region
    $region30: #{tpu_custom_call.1} parent=1 // pred_check
      _
    $region31: #{tpu_custom_call.1} parent=1 // pred_check_branch
      %76 = sbr.rel (0) target = $region33
    $region32: #{tpu_custom_call.1} parent=1 // pred_region
      _
    $region33: #{tpu_custom_call.1} parent=1 // pred_fallthru
      _
    // Predicated region
    $region34: #{tpu_custom_call.1} parent=1 // pred_check
      _
    $region35: #{tpu_custom_call.1} parent=1 // pred_check_branch
      %78 = sbr.rel (0) target = $region37
    $region36: #{tpu_custom_call.1} parent=1 // pred_region
      %s80 = ssub.s32 16, 16
      %81 = vsyncadd [#allocation11], %s80
      %s83 = sshll.u32 [#allocation12], 4
      %s84 = int_to_ptr.vmem [resolvable:$true] %s83
      %86 = dma.hbm_to_vmem [thread:$0]  %s8, 16, %s84, [#allocation11]
    $region37: #{tpu_custom_call.1} parent=1 // pred_fallthru
      _
    // Predicated region
    $region38: #{tpu_custom_call.1} parent=1 // pred_check
      _
    $region39: #{tpu_custom_call.1} parent=1 // pred_check_branch
      %88 = sbr.rel (0) target = $region41
    $region40: #{tpu_custom_call.1} parent=1 // pred_region
      _
    $region41: #{tpu_custom_call.1} parent=1 // pred_fallthru
      _
    // Predicated region
    $region42: #{tpu_custom_call.1} parent=1 // pred_check
      _
    $region43: #{tpu_custom_call.1} parent=1 // pred_check_branch
      %90 = sbr.rel (0) target = $region45
    $region44: #{tpu_custom_call.1} parent=1 // pred_region
      _
    $region45: #{tpu_custom_call.1} parent=1 // pred_fallthru
      _
    // Predicated region
    $region46: #{tpu_custom_call.1} parent=1 // pred_check
      _
    $region47: #{tpu_custom_call.1} parent=1 // pred_check_branch
      %92 = sbr.rel (0) target = $region49
    $region48: #{tpu_custom_call.1} parent=1 // pred_region
      %93 = dma.done [#allocation3], 256
    $region49: #{tpu_custom_call.1} parent=1 // pred_fallthru
      _
    // Predicated region
    $region50: #{tpu_custom_call.1} parent=1 // pred_check
      _
    $region51: #{tpu_custom_call.1} parent=1 // pred_check_branch
      %95 = sbr.rel (0) target = $region53
    $region52: #{tpu_custom_call.1} parent=1 // pred_region
      %96 = dma.done [#allocation7], 16
    $region53: #{tpu_custom_call.1} parent=1 // pred_fallthru
      _
    // Predicated region
    $region54: #{tpu_custom_call.1} parent=1 // pred_check
      _
    $region55: #{tpu_custom_call.1} parent=1 // pred_check_branch
      %98 = sbr.rel (0) target = $region57
    $region56: #{tpu_custom_call.1} parent=1 // pred_region
      %99 = dma.done [#allocation7], 16
    $region57: #{tpu_custom_call.1} parent=1 // pred_fallthru
      _
    // Predicated region
    $region58: #{tpu_custom_call.1} parent=1 // pred_check
      _
    $region59: #{tpu_custom_call.1} parent=1 // pred_check_branch
      %101 = sbr.rel (0) target = $region61
    $region60: #{tpu_custom_call.1} parent=1 // pred_region
      %102 = dma.done [#allocation5], 16
    $region61: #{tpu_custom_call.1} parent=1 // pred_fallthru
      _
    // Predicated region
    $region62: #{tpu_custom_call.1} parent=1 // pred_check
      _
    $region63: #{tpu_custom_call.1} parent=1 // pred_check_branch
      %104 = sbr.rel (0) target = $region65
    $region64: #{tpu_custom_call.1} parent=1 // pred_region
      %105 = dma.done [#allocation11], 16
    $region65: #{tpu_custom_call.1} parent=1 // pred_fallthru
      _
    // Predicated region
    $region66: #{tpu_custom_call.1} parent=1 // pred_check
      _
    $region67: #{tpu_custom_call.1} parent=1 // pred_check_branch
      %107 = sbr.rel (0) target = $region69
    $region68: #{tpu_custom_call.1} parent=1 // pred_region
      %108 = dma.done [#allocation11], 16
    $region69: #{tpu_custom_call.1} parent=1 // pred_fallthru
      _
    %109 = sfence
    %v110 = vld [vmem:[%s0] sm:$0xff]
    %v111 = vld [vmem:[%s0 + $0x8] sm:$0xff]
    %v112 = vld [vmem:[#allocation2] sm:$0xff]
    %v113 = vld [vmem:[#allocation2 + $0x8] sm:$0xff]
    %v114 = vld [vmem:[#allocation6] sm:$0x1]
    %v116 = vlaneseq
    %v117 = vshrl.u32 %v116, 7
    %v118 = vsub.s32 0, %v117
    %v119 = vrot.slane %v114, %v118
    %v121 = vmul.f32 %v110, %v119
    %v122 = vmul.f32 %v111, %v119
    %vm123 = vcmask 130048
    %v124 = vsel %vm123, %v121, 0.0
    %125 = vadd.xlane.f32.xlu0 %v124
    %v126 = vpop.xlane.xlu0 %125
    %v127 = vsel %vm123, %v122, 0.0
    %128 = vadd.xlane.f32.xlu0 %v127
    %v129 = vpop.xlane.xlu0 %128
    %s130 = sld [smem:[#allocation9]]
    %v131 = vstv %s130
    %v132 = vadd.f32 %v126, %v131
    %v133 = vadd.f32 %v129, %v131
    %v134 = vld [vmem:[#allocation8] sm:$0x1]
    %v136 = vlaneseq
    %v137 = vshrl.u32 %v136, 7
    %v138 = vsub.s32 0, %v137
    %v139 = vrot.slane %v134, %v138
    %v141 = vmul.f32 %v112, %v139
    %v142 = vmul.f32 %v113, %v139
    %v143 = vsel %vm123, %v141, 0.0
    %144 = vadd.xlane.f32.xlu0 %v143
    %v145 = vpop.xlane.xlu0 %144
    %v146 = vsel %vm123, %v142, 0.0
    %147 = vadd.xlane.f32.xlu0 %v146
    %v148 = vpop.xlane.xlu0 %147
    %s149 = sld [smem:[#allocation9 + $0x1]]
    %v150 = vstv %s149
    %v151 = vadd.f32 %v145, %v150
    %v152 = vadd.f32 %v148, %v150
    %v153 = vxor.u32 %v132, 2147483648
    %v154 = vxor.u32 %v133, 2147483648
    %v155 = vmul.f32 %v153, 1.442695
    %v156 = vpow.pop %v155
    %v157 = vmul.f32 %v154, 1.442695
    %v158 = vpow.pop %v157
    %v159 = vadd.f32 %v156, 1.0
    %v160 = vadd.f32 %v158, 1.0
    %v161 = vrcp.pop %v159
    %v162 = vmul.f32 1.0, %v161
    %v163 = vrcp.pop %v160
    %v164 = vmul.f32 1.0, %v163
    %v165 = vmul.f32 %v110, %v162
    %v166 = vmul.f32 %v111, %v164
    %v167 = vxor.u32 %v151, 2147483648
    %v168 = vxor.u32 %v152, 2147483648
    %v169 = vmul.f32 %v167, 1.442695
    %v170 = vpow.pop %v169
    %v171 = vmul.f32 %v168, 1.442695
    %v172 = vpow.pop %v171
    %v173 = vadd.f32 %v170, 1.0
    %v174 = vadd.f32 %v172, 1.0
    %v175 = vrcp.pop %v173
    %v176 = vmul.f32 1.0, %v175
    %v177 = vrcp.pop %v174
    %v178 = vmul.f32 1.0, %v177
    %v179 = vmul.f32 %v112, %v176
    %v180 = vmul.f32 %v113, %v178
    %183 = vrot.lane.b32.xlu0 %v179, 16
    %v184 = vpop.permute.xlu0 %183
    %185 = vrot.lane.b32.xlu0 %v180, 16
    %v186 = vpop.permute.xlu0 %185
    %v189 = vsel %vm123, %v165, %v184
    %v190 = vsel %vm123, %v166, %v186
    %v191 = vld [vmem:[%s5] sm:$0xff]
    %v192 = vld [vmem:[%s5 + $0x8] sm:$0xff]
    %v193 = vld [vmem:[%s5 + $0x10] sm:$0xff]
    %v194 = vld [vmem:[%s5 + $0x18] sm:$0xff]
    %v195 = vld [vmem:[#allocation10] sm:$0x1]
    %v197 = vlaneseq
    %v198 = vshrl.u32 %v197, 7
    %v199 = vsub.s32 0, %v198
    %v200 = vrot.slane %v195, %v199
    %vm202 = vcmask 261120
    %v204 = vsel %vm202, %v189, 0
    %v207 = vsel %vm202, %v190, 0
    %209 = vmatprep.subr.mxu0 0.0
    %210 = vmatpush1.msra.mxu0 0.0
    %211 = vmatprep.subr.mxu0 0.0
    %212 = vmatpush1.msra.mxu0 0.0
    %213 = vmatprep.subr.mxu0 0.0
    %214 = vmatpush1.msra.mxu0 0.0
    %215 = vmatprep.subr.mxu0 0.0
    %216 = vmatpush1.msra.mxu0 0.0
    %217 = vmatprep.subr.mxu0 0.0
    %218 = vmatpush1.msra.mxu0 0.0
    %219 = vmatprep.subr.mxu0 0.0
    %220 = vmatpush1.msra.mxu0 0.0
    %221 = vmatprep.subr.mxu0 0.0
    %222 = vmatpush1.msra.mxu0 0.0
    %223 = vmatprep.subr.mxu0 0.0
    %224 = vmatpush1.msra.mxu0 0.0
    %225 = vmatprep.subr.mxu0 0.0
    %226 = vmatpush1.msra.mxu0 0.0
    %227 = vmatprep.subr.mxu0 0.0
    %228 = vmatpush1.msra.mxu0 0.0
    %229 = vmatprep.subr.mxu0 0.0
    %230 = vmatpush1.msra.mxu0 0.0
    %231 = vmatprep.subr.mxu0 0.0
    %232 = vmatpush1.msra.mxu0 0.0
    %233 = vmatprep.subr.mxu0 0.0
    %234 = vmatpush1.msra.mxu0 %v194
    %235 = vmatprep.subr.mxu0 0.0
    %236 = vmatpush1.msra.mxu0 %v193
    %237 = vmatprep.subr.mxu0 0.0
    %238 = vmatpush1.msra.mxu0 %v192
    %239 = vmatprep.subr.mxu0 0.0
    %240 = vmatpush1.msra.mxu0 %v191
    %241 = vmatprep.subr.mxu0 0.0
    %242 = vmatpush2.msra.mxu0 0.0
    %243 = vmatprep.subr.mxu0 0.0
    %244 = vmatpush2.msra.mxu0 0.0
    %245 = vmatprep.subr.mxu0 0.0
    %246 = vmatpush2.msra.mxu0 0.0
    %247 = vmatprep.subr.mxu0 0.0
    %248 = vmatpush2.msra.mxu0 0.0
    %249 = vmatprep.subr.mxu0 0.0
    %250 = vmatpush2.msra.mxu0 0.0
    %251 = vmatprep.subr.mxu0 0.0
    %252 = vmatpush2.msra.mxu0 0.0
    %253 = vmatprep.subr.mxu0 0.0
    %254 = vmatpush2.msra.mxu0 0.0
    %255 = vmatprep.subr.mxu0 0.0
    %256 = vmatpush2.msra.mxu0 0.0
    %257 = vmatprep.subr.mxu0 0.0
    %258 = vmatpush2.msra.mxu0 0.0
    %259 = vmatprep.subr.mxu0 0.0
    %260 = vmatpush2.msra.mxu0 0.0
    %261 = vmatprep.subr.mxu0 0.0
    %262 = vmatpush2.msra.mxu0 0.0
    %263 = vmatprep.subr.mxu0 0.0
    %264 = vmatpush2.msra.mxu0 0.0
    %265 = vmatprep.subr.mxu0 0.0
    %266 = vmatpush2.msra.mxu0 0.0
    %267 = vmatprep.subr.mxu0 0.0
    %268 = vmatpush2.msra.mxu0 0.0
    %269 = vmatprep.subr.mxu0 0.0
    %270 = vmatpush2.msra.mxu0 0.0
    %271 = vmatprep.subr.mxu0 0.0
    %272 = vmatpush2.msra.mxu0 0.0
    %273 = vmatprep.mubr.f32.mxu0 0.0
    %274 = vmatmul.mubr.f32.gmra.mxu0 %v204
    %v275 = vpop.f32.mrf.mxu0
    %v276 = vadd.f32 %v200, %v275
    %v277 = vpop.f32.mrf.mxu0
    %278 = vmatprep.mubr.f32.mxu0 0.0
    %279 = vmatmul.mubr.f32.gmra.mxu0 %v207
    %v280 = vpop.f32.mrf.mxu0
    %v281 = vadd.f32 %v200, %v280
    %v282 = vpop.f32.mrf.mxu0
    %283 = vdwg.mxu0
    %v284 = vmax.f32 %v276, 0.0
    %v285 = vmax.f32 %v281, 0.0
    %v286 = vld [vmem:[%s7] sm:$0xff]
    %v287 = vld [vmem:[%s7 + $0x8] sm:$0xff]
    %v288 = vld [vmem:[%s7 + $0x10] sm:$0xff]
    %v289 = vld [vmem:[%s7 + $0x18] sm:$0xff]
    %v290 = vld [vmem:[#allocation12] sm:$0x1]
    %v292 = vlaneseq
    %v293 = vshrl.u32 %v292, 7
    %v294 = vsub.s32 0, %v293
    %v295 = vrot.slane %v290, %v294
    %v298 = vsel %vm202, %v284, 0
    %v301 = vsel %vm202, %v285, 0
    %303 = vmatprep.subr.mxu0 0.0
    %304 = vmatpush1.msra.mxu0 0.0
    %305 = vmatprep.subr.mxu0 0.0
    %306 = vmatpush1.msra.mxu0 0.0
    %307 = vmatprep.subr.mxu0 0.0
    %308 = vmatpush1.msra.mxu0 0.0
    %309 = vmatprep.subr.mxu0 0.0
    %310 = vmatpush1.msra.mxu0 0.0
    %311 = vmatprep.subr.mxu0 0.0
    %312 = vmatpush1.msra.mxu0 0.0
    %313 = vmatprep.subr.mxu0 0.0
    %314 = vmatpush1.msra.mxu0 0.0
    %315 = vmatprep.subr.mxu0 0.0
    %316 = vmatpush1.msra.mxu0 0.0
    %317 = vmatprep.subr.mxu0 0.0
    %318 = vmatpush1.msra.mxu0 0.0
    %319 = vmatprep.subr.mxu0 0.0
    %320 = vmatpush1.msra.mxu0 0.0
    %321 = vmatprep.subr.mxu0 0.0
    %322 = vmatpush1.msra.mxu0 0.0
    %323 = vmatprep.subr.mxu0 0.0
    %324 = vmatpush1.msra.mxu0 0.0
    %325 = vmatprep.subr.mxu0 0.0
    %326 = vmatpush1.msra.mxu0 0.0
    %327 = vmatprep.subr.mxu0 0.0
    %328 = vmatpush1.msra.mxu0 %v289
    %329 = vmatprep.subr.mxu0 0.0
    %330 = vmatpush1.msra.mxu0 %v288
    %331 = vmatprep.subr.mxu0 0.0
    %332 = vmatpush1.msra.mxu0 %v287
    %333 = vmatprep.subr.mxu0 0.0
    %334 = vmatpush1.msra.mxu0 %v286
    %335 = vmatprep.subr.mxu0 0.0
    %336 = vmatpush2.msra.mxu0 0.0
    %337 = vmatprep.subr.mxu0 0.0
    %338 = vmatpush2.msra.mxu0 0.0
    %339 = vmatprep.subr.mxu0 0.0
    %340 = vmatpush2.msra.mxu0 0.0
    %341 = vmatprep.subr.mxu0 0.0
    %342 = vmatpush2.msra.mxu0 0.0
    %343 = vmatprep.subr.mxu0 0.0
    %344 = vmatpush2.msra.mxu0 0.0
    %345 = vmatprep.subr.mxu0 0.0
    %346 = vmatpush2.msra.mxu0 0.0
    %347 = vmatprep.subr.mxu0 0.0
    %348 = vmatpush2.msra.mxu0 0.0
    %349 = vmatprep.subr.mxu0 0.0
    %350 = vmatpush2.msra.mxu0 0.0
    %351 = vmatprep.subr.mxu0 0.0
    %352 = vmatpush2.msra.mxu0 0.0
    %353 = vmatprep.subr.mxu0 0.0
    %354 = vmatpush2.msra.mxu0 0.0
    %355 = vmatprep.subr.mxu0 0.0
    %356 = vmatpush2.msra.mxu0 0.0
    %357 = vmatprep.subr.mxu0 0.0
    %358 = vmatpush2.msra.mxu0 0.0
    %359 = vmatprep.subr.mxu0 0.0
    %360 = vmatpush2.msra.mxu0 0.0
    %361 = vmatprep.subr.mxu0 0.0
    %362 = vmatpush2.msra.mxu0 0.0
    %363 = vmatprep.subr.mxu0 0.0
    %364 = vmatpush2.msra.mxu0 0.0
    %365 = vmatprep.subr.mxu0 0.0
    %366 = vmatpush2.msra.mxu0 0.0
    %367 = vmatprep.mubr.f32.mxu0 0.0
    %368 = vmatmul.mubr.f32.gmra.mxu0 %v298
    %v369 = vpop.f32.mrf.mxu0
    %v370 = vadd.f32 %v295, %v369
    %v371 = vpop.f32.mrf.mxu0
    %372 = vmatprep.mubr.f32.mxu0 0.0
    %373 = vmatmul.mubr.f32.gmra.mxu0 %v301
    %v374 = vpop.f32.mrf.mxu0
    %v375 = vadd.f32 %v295, %v374
    %v376 = vpop.f32.mrf.mxu0
    %377 = vdwg.mxu0
    %v378 = vmax.f32 %v370, 0.0
    %v379 = vmax.f32 %v375, 0.0
    %v380 = vld [vmem:[%s9] sm:$0xff]
    %v381 = vld [vmem:[%s9 + $0x8] sm:$0xff]
    %v382 = vld [vmem:[%s10] sm:$0x1]
    %v384 = vlaneseq
    %v385 = vshrl.u32 %v384, 7
    %v386 = vsub.s32 0, %v385
    %v387 = vrot.slane %v382, %v386
    %v390 = vsel %vm123, %v378, 0
    %v393 = vsel %vm123, %v379, 0
    %395 = vmatprep.subr.mxu0 0.0
    %396 = vmatpush1.msra.mxu0 0.0
    %397 = vmatprep.subr.mxu0 0.0
    %398 = vmatpush1.msra.mxu0 0.0
    %399 = vmatprep.subr.mxu0 0.0
    %400 = vmatpush1.msra.mxu0 0.0
    %401 = vmatprep.subr.mxu0 0.0
    %402 = vmatpush1.msra.mxu0 0.0
    %403 = vmatprep.subr.mxu0 0.0
    %404 = vmatpush1.msra.mxu0 0.0
    %405 = vmatprep.subr.mxu0 0.0
    %406 = vmatpush1.msra.mxu0 0.0
    %407 = vmatprep.subr.mxu0 0.0
    %408 = vmatpush1.msra.mxu0 0.0
    %409 = vmatprep.subr.mxu0 0.0
    %410 = vmatpush1.msra.mxu0 0.0
    %411 = vmatprep.subr.mxu0 0.0
    %412 = vmatpush1.msra.mxu0 0.0
    %413 = vmatprep.subr.mxu0 0.0
    %414 = vmatpush1.msra.mxu0 0.0
    %415 = vmatprep.subr.mxu0 0.0
    %416 = vmatpush1.msra.mxu0 0.0
    %417 = vmatprep.subr.mxu0 0.0
    %418 = vmatpush1.msra.mxu0 0.0
    %419 = vmatprep.subr.mxu0 0.0
    %420 = vmatpush1.msra.mxu0 0.0
    %421 = vmatprep.subr.mxu0 0.0
    %422 = vmatpush1.msra.mxu0 0.0
    %423 = vmatprep.subr.mxu0 0.0
    %424 = vmatpush1.msra.mxu0 %v381
    %425 = vmatprep.subr.mxu0 0.0
    %426 = vmatpush1.msra.mxu0 %v380
    %427 = vmatprep.subr.mxu0 0.0
    %428 = vmatpush2.msra.mxu0 0.0
    %429 = vmatprep.subr.mxu0 0.0
    %430 = vmatpush2.msra.mxu0 0.0
    %431 = vmatprep.subr.mxu0 0.0
    %432 = vmatpush2.msra.mxu0 0.0
    %433 = vmatprep.subr.mxu0 0.0
    %434 = vmatpush2.msra.mxu0 0.0
    %435 = vmatprep.subr.mxu0 0.0
    %436 = vmatpush2.msra.mxu0 0.0
    %437 = vmatprep.subr.mxu0 0.0
    %438 = vmatpush2.msra.mxu0 0.0
    %439 = vmatprep.subr.mxu0 0.0
    %440 = vmatpush2.msra.mxu0 0.0
    %441 = vmatprep.subr.mxu0 0.0
    %442 = vmatpush2.msra.mxu0 0.0
    %443 = vmatprep.subr.mxu0 0.0
    %444 = vmatpush2.msra.mxu0 0.0
    %445 = vmatprep.subr.mxu0 0.0
    %446 = vmatpush2.msra.mxu0 0.0
    %447 = vmatprep.subr.mxu0 0.0
    %448 = vmatpush2.msra.mxu0 0.0
    %449 = vmatprep.subr.mxu0 0.0
    %450 = vmatpush2.msra.mxu0 0.0
    %451 = vmatprep.subr.mxu0 0.0
    %452 = vmatpush2.msra.mxu0 0.0
    %453 = vmatprep.subr.mxu0 0.0
    %454 = vmatpush2.msra.mxu0 0.0
    %455 = vmatprep.subr.mxu0 0.0
    %456 = vmatpush2.msra.mxu0 0.0
    %457 = vmatprep.subr.mxu0 0.0
    %458 = vmatpush2.msra.mxu0 0.0
    %459 = vmatprep.mubr.f32.mxu0 0.0
    %460 = vmatmul.mubr.f32.gmra.mxu0 %v390
    %v461 = vpop.f32.mrf.mxu0
    %v462 = vadd.f32 %v387, %v461
    %v463 = vpop.f32.mrf.mxu0
    %464 = vmatprep.mubr.f32.mxu0 0.0
    %465 = vmatmul.mubr.f32.gmra.mxu0 %v393
    %v466 = vpop.f32.mrf.mxu0
    %v467 = vadd.f32 %v387, %v466
    %v468 = vpop.f32.mrf.mxu0
    %469 = vdwg.mxu0
    %470 = vst [vmem:[#allocation13] sm:$0xff] %v462
    %471 = vst [vmem:[#allocation13 + $0x8] sm:$0xff] %v467
    // Predicated region
    $region70: #{tpu_custom_call.1} parent=1 // pred_check
      _
    $region71: #{tpu_custom_call.1} parent=1 // pred_check_branch
      %473 = sbr.rel (0) target = $region73
    $region72: #{tpu_custom_call.1} parent=1 // pred_region
      %s475 = ssub.s32 256, 256
      %476 = vsyncadd [#allocation4], %s475
      %s477 = sshll.u32 [#allocation13], 4
      %s478 = int_to_ptr.vmem [resolvable:$true] %s477
      %483 = dma.vmem_to_hbm [thread:$0]  %s478, 256, %s11, [#allocation4], 128, 128, 8
    $region73: #{tpu_custom_call.1} parent=1 // pred_fallthru
      _
    // Predicated region
    $region74: #{tpu_custom_call.1} parent=1 // pred_check
      _
    $region75: #{tpu_custom_call.1} parent=1 // pred_check_branch
      %485 = sbr.rel (0) target = $region77
    $region76: #{tpu_custom_call.1} parent=1 // pred_region
      %486 = dma.done [#allocation4], 256
    $region77: #{tpu_custom_call.1} parent=1 // pred_fallthru
      _
    %487 = vsyncpa [#allocation3], 1
    %488 = vsyncpa [#allocation7], 1
    %489 = vsyncpa [#allocation11], 1
    %490 = vsyncpa [#allocation4], 1
    %491 = vsyncpa [#allocation5], 1

</llo_original>
